<compile_context>
chip_gen: v7x
topology: tpu7x:2x2x1
jax: 0.10.0
libtpu: 0.0.40
codegen_flags: <defaults>
</compile_context>

<pallas_src>
import functools

import jax
import jax.numpy as jnp
from jax.experimental import pallas as pl
from jax.experimental.pallas import tpu as pltpu

EPSILON = 1.1920928955078125e-07  # float32 machine epsilon (torch default EPSILON)

_LANES = 128
_MAX_BLOCK_BYTES = 16 * 1024 * 1024   # never exceed 16 MiB per operand block
_VMEM_HEADROOM = 8 * 1024 * 1024      # leave room for Mosaic internal scratch


# --------------------------------------------------------------------------
# Kernels
# --------------------------------------------------------------------------
def _abs_kernel(x_ref, o_ref):
    """Elementwise |x| on one (rows, 128) tile."""
    o_ref[...] = jnp.abs(x_ref[...])


def _complex_abs_kernel(re_ref, im_ref, o_ref, *, eps):
    """|x + eps| for complex x, eps added to the real part only
    (matches torch_complex ComplexTensor.__add__ with a real scalar)."""
    re = re_ref[...].astype(jnp.float32) + eps
    im = im_ref[...].astype(jnp.float32)
    # TODO(synk): naive sqrt(re^2 + im^2) matches torch_complex's abs(); it is
    # not the hypot-style formulation jnp.abs(complex) uses.
    o_ref[...] = jnp.sqrt(re * re + im * im).astype(o_ref.dtype)


# --------------------------------------------------------------------------
# Tiling helpers
# --------------------------------------------------------------------------
def _vmem_limit_bytes():
    """Generation-aware scoped-VMEM limit: ~3/4 of physical, capped at 96 MiB.
    128 MiB chips (v5e/v6e) -> 96 MiB; 64 MiB chips (v7x) -> 48 MiB."""
    cap = 128 * 1024 * 1024
    try:
        info = pltpu.get_tpu_info()
        cap = int(getattr(info, "vmem_capacity_bytes", cap) or cap)
    except Exception:
        pass
    return max(32 * 1024 * 1024, min(cap * 3 // 4, 96 * 1024 * 1024))


def _pick_row_tile(num_rows, num_lanes, itemsize, block_bytes):
    """Row tile sized for ~block_bytes per operand block; rounded to the
    dtype's sublane pack (8 for f32, 16 for bf16, 32 for int8/fp8)."""
    pack = max(8, 32 // max(itemsize, 1))
    t = (block_bytes // max(num_lanes * itemsize, 1)) // pack * pack
    t = max(t, pack)
    return num_rows if t >= num_rows else t


def _as_lane_dense(a):
    """Flat (rows, 128) view.  Pads the flat array up to a multiple of 128 if
    needed so every kernel store is a full-lane unmasked vst; returns the
    original element count so the caller can slice the result back."""
    flat = a.reshape(-1)
    total = flat.size
    pad = (-total) % _LANES
    if pad:
        flat = jnp.pad(flat, (0, pad))
    return flat.reshape(-1, _LANES), total


def _make_call(kernel, num_inputs, shape2d, out_dtype, cost):
    rows, lanes = shape2d
    itemsize = jnp.dtype(out_dtype).itemsize
    vmem_limit = _vmem_limit_bytes()
    usable = max(vmem_limit - _VMEM_HEADROOM, 8 * 1024 * 1024)
    # (num_inputs + 1) operands, each double-buffered by the BlockSpec pipeline.
    block_bytes = max(usable // (2 * (num_inputs + 1)), 1 << 20)
    block_bytes = min(block_bytes, _MAX_BLOCK_BYTES)
    tile_r = _pick_row_tile(rows, lanes, itemsize, block_bytes)
    spec = pl.BlockSpec((tile_r, lanes), lambda i: (i, 0))
    return pl.pallas_call(
        kernel,
        out_shape=jax.ShapeDtypeStruct((rows, lanes), out_dtype),
        grid=(pl.cdiv(rows, tile_r),),
        in_specs=[spec] * num_inputs,
        out_specs=spec,
        compiler_params=pltpu.CompilerParams(
            # "parallel": lets the two v7x TensorCores split the row-tile loop.
            dimension_semantics=("parallel",),
            vmem_limit_bytes=vmem_limit,
        ),
        cost_estimate=cost,
    )


# --------------------------------------------------------------------------
# Wrappers
# --------------------------------------------------------------------------
def abs_pallas(x):
    """y = |x| for a real array of any shape (module uses N x T x F)."""
    x2, total = _as_lane_dense(x)
    cost = pl.CostEstimate(
        flops=total, transcendentals=0, bytes_accessed=2 * x2.nbytes)
    y2 = _make_call(_abs_kernel, 1, x2.shape, x.dtype, cost)(x2)
    return y2.reshape(-1)[:total].reshape(x.shape)


def complex_abs_pallas(x, eps):
    """y = |x + eps| for a complex array; output is the matching real dtype."""
    if x.dtype == jnp.complex128:
        # TODO(synk): TPU/Pallas has no practical f64 path; compute in f32.
        x = x.astype(jnp.complex64)
    # TODO(synk): re/im are materialized by a single fused XLA pass in the
    # wrapper; lax.bitcast_convert_type rejects complex dtypes and Pallas TPU
    # kernels cannot take complex refs, so a zero-copy interleaved view into
    # the kernel is not available.  Kernel-side traffic is the 12 B/elem min.
    re2, total = _as_lane_dense(jnp.real(x))
    im2, _ = _as_lane_dense(jnp.imag(x))
    out_dtype = re2.dtype
    cost = pl.CostEstimate(
        flops=4 * total, transcendentals=total,
        bytes_accessed=2 * re2.nbytes + im2.nbytes)
    kernel = functools.partial(_complex_abs_kernel, eps=float(eps))
    y2 = _make_call(kernel, 2, re2.shape, out_dtype, cost)(re2, im2)
    return y2.reshape(-1)[:total].reshape(x.shape)


class AbsTransform:
    """JAX/Pallas port of the PyTorch AbsTransform forward pass."""

    def __init__(self, eps=EPSILON):
        self.eps = eps

    def extra_repr(self):
        return f"eps={self.eps:.3e}"

    def __call__(self, x):
        if jnp.issubdtype(x.dtype, jnp.complexfloating):
            # ComplexTensor path: x = x + eps (real part only), then magnitude.
            return complex_abs_pallas(x, self.eps)
        return abs_pallas(x)


# --------------------------------------------------------------------------
# Demo / self-check
# --------------------------------------------------------------------------
if __name__ == "__main__":
    key = jax.random.PRNGKey(0)
    k1, k2, k3, k4, k5 = jax.random.split(key, 5)

    module = AbsTransform()

    # Small N x T x F shapes consistent with the module (lane-divisible total).
    N, T, F = 2, 16, 32
    x = jax.random.normal(k1, (N, T, F), dtype=jnp.float32)
    xc = (jax.random.normal(k2, (N, T, F), dtype=jnp.float32)
          + 1j * jax.random.normal(k3, (N, T, F), dtype=jnp.float32)
          ).astype(jnp.complex64)

    # Real-tensor path.
    y = jax.block_until_ready(module(x))
    assert y.shape == x.shape and y.dtype == x.dtype
    assert jnp.allclose(y, jnp.abs(x), atol=1e-6, rtol=1e-6), \
        "real abs mismatch vs reference"

    # Complex-tensor path (eps added to the real part, then magnitude).
    yc = jax.block_until_ready(module(xc))
    yc_ref = jnp.abs(xc + module.eps)
    assert yc.shape == xc.shape and yc.dtype == jnp.float32
    assert jnp.allclose(yc, yc_ref, atol=1e-5, rtol=1e-5), \
        "complex abs mismatch vs reference"

    # Odd shape (total not divisible by 128) exercises the padded lane-dense path.
    xo = jax.random.normal(k4, (3, 5, 7), dtype=jnp.float32)
    yo = jax.block_until_ready(module(xo))
    assert yo.shape == xo.shape
    assert jnp.allclose(yo, jnp.abs(xo), atol=1e-6, rtol=1e-6), \
        "padded real abs mismatch vs reference"

    xoc = (xo + 1j * jax.random.normal(k5, (3, 5, 7), dtype=jnp.float32)
           ).astype(jnp.complex64)
    yoc = jax.block_until_ready(module(xoc))
    assert yoc.shape == xoc.shape and yoc.dtype == jnp.float32
    assert jnp.allclose(yoc, jnp.abs(xoc + module.eps), atol=1e-5, rtol=1e-5), \
        "padded complex abs mismatch vs reference"

    print("KERNEL_OK")
</pallas_src>

<mosaic_0001>
module attributes {stable_mosaic.version = 11 : i64} {
  func.func @_abs_kernel(%arg0: i32, %arg1: memref<8x128xf32, #tpu.memory_space<vmem>>, %arg2: memref<8x128xf32, #tpu.memory_space<vmem>>) attributes {dimension_semantics = [#tpu.dimension_semantics<parallel>], iteration_bounds = array<i64: 1>, scalar_prefetch = 0 : i64, scratch_operands = 0 : i64, tpu.core_type = #tpu.core_type<tc>, window_params = [{transform_indices = @transform_0, window_bounds = array<i64: 8, 128>}, {transform_indices = @transform_1, window_bounds = array<i64: 8, 128>}]} {
    %c0 = arith.constant 0 : index
    %c0_0 = arith.constant 0 : index
    %0 = vector.load %arg1[%c0, %c0_0] : memref<8x128xf32, #tpu.memory_space<vmem>>, vector<8x128xf32>
    %1 = math.absf %0 : vector<8x128xf32>
    %c0_1 = arith.constant 0 : index
    %c0_2 = arith.constant 0 : index
    %2 = vector.load %arg2[%c0_1, %c0_2] : memref<8x128xf32, #tpu.memory_space<vmem>>, vector<8x128xf32>
    tpu.vector_store %arg2[%c0_1, %c0_2], %1 {strides = array<i32>} : memref<8x128xf32, #tpu.memory_space<vmem>>, vector<8x128xf32>,
    return
  }
  func.func @transform_0(%arg0: i32) -> (i32, i32) {
    %c0_i32 = arith.constant 0 : i32
    %c0_i32_0 = arith.constant 0 : i32
    return %arg0, %c0_i32 : i32, i32
  }
  func.func @transform_1(%arg0: i32) -> (i32, i32) {
    %c0_i32 = arith.constant 0 : i32
    %c0_i32_0 = arith.constant 0 : i32
    return %arg0, %c0_i32 : i32, i32
  }
}

</mosaic_0001>

<llo_original>
// kernel: tpu_custom_call.1
$region0: #{tpu_custom_call.1}
  #allocation0 [shape = 'u32[]', space=smem, size = 0x4, offset = 0x4, fixed_abs, tag = 'smem constant byte address 0x4 - core index']
  #allocation1 [shape = 'u32[144,128]{1,0:T(1,128)}', space=vmem, size = 0x12000, scoped, tag = 'internal scratch']
  %s0 = inlined_call_operand.hbm [shape: f32[8,128], index: 0, kind: input, shape index: {}]
  %s1 = inlined_call_operand.hbm [shape: f32[8,128], index: 1, kind: output, shape index: {}]
  %s2 = sld [smem:[#allocation0]]
  $region18: #{tpu_custom_call.1} parent=0
    _
  %s4 = ssub.s32 1, %s2
  %s5 = scalar_select 0, %s4, %s2
  $region1: #{tpu_custom_call.1} parent=0
    #allocation2 [shape = 'u8[4096]{0}', space=vmem, size = 0x1000, scoped, tag = 'input window, operand 0, single buffered']
    #allocation3 [shape = 's32[1]{0}', space=sflag, size = 0x4, scoped, tag = 'scoped memory for tpu_custom_call.1']
    #allocation4 [shape = 's32[1]{0}', space=sflag, size = 0x4, scoped, tag = 'scoped memory for tpu_custom_call.1']
    #allocation5 [shape = 'u8[4096]{0}', space=vmem, size = 0x1000, scoped, tag = 'output window, operand 0, single buffered']
    %6 = vsyncpa [#allocation3], 0
    %7 = vsyncpa [#allocation4], 0
    // Predicated region
    $region2: #{tpu_custom_call.1} parent=1 // pred_check
      _
    $region3: #{tpu_custom_call.1} parent=1 // pred_check_branch
      %9 = sbr.rel (0) target = $region5
    $region4: #{tpu_custom_call.1} parent=1 // pred_region
      %s11 = ssub.s32 128, 128
      %12 = vsyncadd [#allocation3], %s11
      %s14 = sshll.u32 [#allocation2], 4
      %s15 = int_to_ptr.vmem [resolvable:$true] %s14
      %17 = dma.hbm_to_vmem [thread:$0]  %s0, 128, %s15, [#allocation3]
    $region5: #{tpu_custom_call.1} parent=1 // pred_fallthru
      _
    // Predicated region
    $region6: #{tpu_custom_call.1} parent=1 // pred_check
      _
    $region7: #{tpu_custom_call.1} parent=1 // pred_check_branch
      %19 = sbr.rel (0) target = $region9
    $region8: #{tpu_custom_call.1} parent=1 // pred_region
      %20 = dma.done [#allocation3], 128
    $region9: #{tpu_custom_call.1} parent=1 // pred_fallthru
      _
    %v21 = vld [vmem:[#allocation2] sm:$0xff]
    %v22 = vand.u32 2147483647, %v21
    %23 = vst [vmem:[#allocation5] sm:$0xff] %v22
    // Predicated region
    $region10: #{tpu_custom_call.1} parent=1 // pred_check
      _
    $region11: #{tpu_custom_call.1} parent=1 // pred_check_branch
      %25 = sbr.rel (0) target = $region13
    $region12: #{tpu_custom_call.1} parent=1 // pred_region
      %s27 = ssub.s32 128, 128
      %28 = vsyncadd [#allocation4], %s27
      %s30 = sshll.u32 [#allocation5], 4
      %s31 = int_to_ptr.vmem [resolvable:$true] %s30
      %33 = dma.vmem_to_hbm [thread:$0]  %s31, 128, %s1, [#allocation4]
    $region13: #{tpu_custom_call.1} parent=1 // pred_fallthru
      _
    // Predicated region
    $region14: #{tpu_custom_call.1} parent=1 // pred_check
      _
    $region15: #{tpu_custom_call.1} parent=1 // pred_check_branch
      %35 = sbr.rel (0) target = $region17
    $region16: #{tpu_custom_call.1} parent=1 // pred_region
      %36 = dma.done [#allocation4], 128
    $region17: #{tpu_custom_call.1} parent=1 // pred_fallthru
      _
    %37 = vsyncpa [#allocation3], 1
    %38 = vsyncpa [#allocation4], 1

</llo_original>
